<compile_context>
chip_gen: v7x
topology: tpu7x:2x2x1
jax: 0.10.0
libtpu: 0.0.40
codegen_flags: <defaults>
</compile_context>

<pallas_src>
import jax
import jax.numpy as jnp
from jax import lax
from jax.experimental import pallas as pl
from jax.experimental.pallas import tpu as pltpu


def _normalized_relu_kernel(x_ref, o_ref):
    if x_ref.dtype == jnp.float32:
        x = x_ref[...]
        inv_norm = lax.rsqrt(jnp.sum(x * x, axis=-1, keepdims=True))
        scaled = x * inv_norm
    else:
        # Promote only for the reduction; don't pin a 2x-sized f32 copy of the
        # tile across the whole body — re-read the resident tile for scaling.
        x32 = x_ref[...].astype(jnp.float32)
        inv_norm = lax.rsqrt(jnp.sum(x32 * x32, axis=-1, keepdims=True))
        scaled = x_ref[...].astype(jnp.float32) * inv_norm
    o_ref[...] = jnp.log(jnp.maximum(scaled, 0.0) + 1e-12).astype(o_ref.dtype)


def _pick_block_rows(B, D, dtype, *, target_tile_bytes=1 << 20, min_steps=8):
    """Row tile: ~target_tile_bytes f32 working set, >= min_steps grid steps,
    even step count when possible (v7x megacore balance), sublane-aligned."""
    itemsize = jnp.dtype(dtype).itemsize
    # Sublane packing minimum: 8 rows for 32-bit, 16 for bf16, 32 for int8/fp8.
    min_rows = max(8, 32 // max(itemsize, 1))

    rows = max(min_rows, (target_tile_bytes // (4 * D)) // min_rows * min_rows)
    # Never larger than the (sublane-padded) batch.
    rows = min(rows, pl.cdiv(B, min_rows) * min_rows)

    # Keep >= min_steps pipeline stages when the batch permits, so the
    # prefetch(i+1)/writeback(i-1) pipeline actually overlaps the DMAs.
    while rows > min_rows and pl.cdiv(B, rows) < min_steps:
        rows = max(min_rows, (rows // 2) // min_rows * min_rows)

    # Prefer an even step count so both v7x TensorCores get balanced work.
    if rows > min_rows and pl.cdiv(B, rows) % 2 == 1:
        candidate = rows - min_rows
        while candidate >= min_rows and pl.cdiv(B, candidate) % 2 == 1:
            candidate -= min_rows
        if candidate >= min_rows:
            rows = candidate
    return rows


def _input_buffer_count():
    """Pipeline depth for the input BlockSpec, generation-aware.

    v5e/v6e (128 MiB physical VMEM): a 3rd ~1 MiB input buffer hides
    step-boundary DMA latency at negligible VMEM cost.  v7x (64 MiB physical,
    32 MiB scoped default) keeps the default double-buffering.
    """
    try:
        info = pltpu.get_tpu_info()
        if info.vmem_capacity_bytes >= (100 << 20):
            return 3
    except Exception:
        pass
    return 2


def normalized_relu(x, *, block_rows=None, donate_input=False):
    """Pallas TPU implementation of NormalizedRelu for x of shape [B, D]."""
    B, D = x.shape
    if block_rows is None:
        block_rows = _pick_block_rows(B, D, x.dtype)
    grid = (pl.cdiv(B, block_rows),)

    itemsize = jnp.dtype(x.dtype).itemsize
    cost = pl.CostEstimate(
        flops=5 * B * D,                     # square, reduce-add, mul, max, add-eps
        transcendentals=B * D + B,           # log per element + rsqrt per row
        bytes_accessed=2 * B * D * itemsize, # read x + write out
    )

    buffers = _input_buffer_count()
    if buffers > 2:
        in_spec = pl.BlockSpec((block_rows, D), lambda i: (i, 0),
                               pipeline_mode=pl.Buffered(buffers))
    else:
        in_spec = pl.BlockSpec((block_rows, D), lambda i: (i, 0))

    extra_kwargs = {}
    if donate_input:
        # Output has identical shape/dtype; reuse x's HBM buffer.
        extra_kwargs["input_output_aliases"] = {0: 0}

    return pl.pallas_call(
        _normalized_relu_kernel,
        out_shape=jax.ShapeDtypeStruct((B, D), x.dtype),
        grid_spec=pltpu.PrefetchScalarGridSpec(
            num_scalar_prefetch=0,
            grid=grid,
            in_specs=[in_spec],
            out_specs=pl.BlockSpec((block_rows, D), lambda i: (i, 0)),
        ),
        compiler_params=pltpu.CompilerParams(
            dimension_semantics=("parallel",),
            vmem_limit_bytes=32 << 20,
        ),
        cost_estimate=cost,
        **extra_kwargs,
    )(x)


def normalized_relu_ref(x):
    """Pure-JAX reference mirroring the PyTorch forward."""
    norms = jnp.linalg.norm(x, axis=1)
    scaled = x * (1.0 / norms[:, None])
    return jnp.log(jax.nn.relu(scaled) + 1e-12)


if __name__ == "__main__":
    key = jax.random.PRNGKey(0)

    # Small shape consistent with the module (batch=8, hidden=32).
    B, D = 8, 32
    x = jax.random.normal(key, (B, D), dtype=jnp.float32)
    out = jax.block_until_ready(normalized_relu(x))
    ref = normalized_relu_ref(x)
    assert out.shape == ref.shape and out.dtype == ref.dtype
    assert jnp.allclose(out, ref, atol=1e-5, rtol=1e-5), "mismatch vs reference (small)"

    # Second check: multi-step grid, ragged last block, even-step tiling path.
    B2, D2 = 520, 256
    x2 = jax.random.normal(jax.random.PRNGKey(1), (B2, D2), dtype=jnp.float32)
    out2 = jax.block_until_ready(normalized_relu(x2))
    ref2 = normalized_relu_ref(x2)
    assert jnp.allclose(out2, ref2, atol=1e-5, rtol=1e-5), "mismatch vs reference (tiled)"

    # Third check: bf16 input exercises the two-read (no resident f32 copy) path.
    x3 = jax.random.normal(jax.random.PRNGKey(2), (256, 512), dtype=jnp.bfloat16)
    out3 = jax.block_until_ready(normalized_relu(x3))
    ref3 = normalized_relu_ref(x3.astype(jnp.float32)).astype(jnp.bfloat16)
    assert jnp.allclose(out3.astype(jnp.float32), ref3.astype(jnp.float32),
                        atol=2e-2, rtol=2e-2), "mismatch vs reference (bf16)"

    print("KERNEL_OK")
</pallas_src>

<mosaic_0001>
module attributes {stable_mosaic.version = 11 : i64} {
  func.func @_normalized_relu_kernel(%arg0: i32, %arg1: memref<8x32xf32, #tpu.memory_space<vmem>>, %arg2: memref<8x32xf32, #tpu.memory_space<vmem>>) attributes {dimension_semantics = [#tpu.dimension_semantics<parallel>], iteration_bounds = array<i64: 1>, scalar_prefetch = 0 : i64, scratch_operands = 0 : i64, tpu.core_type = #tpu.core_type<tc>, window_params = [{transform_indices = @transform_0, window_bounds = array<i64: 8, 32>}, {transform_indices = @transform_1, window_bounds = array<i64: 8, 32>}]} {
    %c0 = arith.constant 0 : index
    %c0_0 = arith.constant 0 : index
    %0 = vector.load %arg1[%c0, %c0_0] : memref<8x32xf32, #tpu.memory_space<vmem>>, vector<8x32xf32>
    %1 = arith.mulf %0, %0 : vector<8x32xf32>
    %cst = arith.constant dense<0.000000e+00> : vector<8xf32>
    %2 = vector.multi_reduction <add>, %1, %cst [1] : vector<8x32xf32> to vector<8xf32>
    %3 = vector.shape_cast %2 : vector<8xf32> to vector<8x1xf32>
    %4 = math.rsqrt %3 : vector<8x1xf32>
    %5 = vector.broadcast %4 : vector<8x1xf32> to vector<8x32xf32>
    %6 = arith.mulf %0, %5 : vector<8x32xf32>
    %cst_1 = arith.constant 0.000000e+00 : f32
    %7 = vector.broadcast %cst_1 : f32 to vector<8x32xf32>
    %8 = arith.maximumf %6, %7 : vector<8x32xf32>
    %cst_2 = arith.constant 9.99999996E-13 : f32
    %9 = vector.broadcast %cst_2 : f32 to vector<8x32xf32>
    %10 = arith.addf %8, %9 : vector<8x32xf32>
    %11 = math.log %10 : vector<8x32xf32>
    %c0_3 = arith.constant 0 : index
    %c0_4 = arith.constant 0 : index
    %12 = vector.load %arg2[%c0_3, %c0_4] : memref<8x32xf32, #tpu.memory_space<vmem>>, vector<8x32xf32>
    tpu.vector_store %arg2[%c0_3, %c0_4], %11 {strides = array<i32>} : memref<8x32xf32, #tpu.memory_space<vmem>>, vector<8x32xf32>,
    return
  }
  func.func @transform_0(%arg0: i32) -> (i32, i32) {
    %c0_i32 = arith.constant 0 : i32
    %c0_i32_0 = arith.constant 0 : i32
    return %arg0, %c0_i32 : i32, i32
  }
  func.func @transform_1(%arg0: i32) -> (i32, i32) {
    %c0_i32 = arith.constant 0 : i32
    %c0_i32_0 = arith.constant 0 : i32
    return %arg0, %c0_i32 : i32, i32
  }
}

</mosaic_0001>

<llo_original>
// kernel: tpu_custom_call.1
$region0: #{tpu_custom_call.1}
  #allocation0 [shape = 'u32[]', space=smem, size = 0x4, offset = 0x4, fixed_abs, tag = 'smem constant byte address 0x4 - core index']
  #allocation1 [shape = 'u32[144,128]{1,0:T(1,128)}', space=vmem, size = 0x12000, scoped, tag = 'internal scratch']
  %s0 = inlined_call_operand.hbm [shape: f32[8,32], index: 0, kind: input, shape index: {}]
  %s1 = inlined_call_operand.hbm [shape: f32[8,32], index: 1, kind: output, shape index: {}]
  %s2 = sld [smem:[#allocation0]]
  $region18: #{tpu_custom_call.1} parent=0
    _
  %s4 = ssub.s32 1, %s2
  %s5 = scalar_select 0, %s4, %s2
  $region1: #{tpu_custom_call.1} parent=0
    #allocation2 [shape = 'u8[4096]{0}', space=vmem, size = 0x1000, scoped, tag = 'input window, operand 0, single buffered']
    #allocation3 [shape = 's32[1]{0}', space=sflag, size = 0x4, scoped, tag = 'scoped memory for tpu_custom_call.1']
    #allocation4 [shape = 's32[1]{0}', space=sflag, size = 0x4, scoped, tag = 'scoped memory for tpu_custom_call.1']
    #allocation5 [shape = 'u8[4096]{0}', space=vmem, size = 0x1000, scoped, tag = 'output window, operand 0, single buffered']
    %6 = vsyncpa [#allocation3], 0
    %7 = vsyncpa [#allocation4], 0
    // Predicated region
    $region2: #{tpu_custom_call.1} parent=1 // pred_check
      _
    $region3: #{tpu_custom_call.1} parent=1 // pred_check_branch
      %9 = sbr.rel (0) target = $region5
    $region4: #{tpu_custom_call.1} parent=1 // pred_region
      %s11 = ssub.s32 128, 128
      %12 = vsyncadd [#allocation3], %s11
      %s14 = sshll.u32 [#allocation2], 4
      %s15 = int_to_ptr.vmem [resolvable:$true] %s14
      %17 = dma.hbm_to_vmem [thread:$0]  %s0, 128, %s15, [#allocation3]
    $region5: #{tpu_custom_call.1} parent=1 // pred_fallthru
      _
    // Predicated region
    $region6: #{tpu_custom_call.1} parent=1 // pred_check
      _
    $region7: #{tpu_custom_call.1} parent=1 // pred_check_branch
      %19 = sbr.rel (0) target = $region9
    $region8: #{tpu_custom_call.1} parent=1 // pred_region
      %20 = dma.done [#allocation3], 128
    $region9: #{tpu_custom_call.1} parent=1 // pred_fallthru
      _
    %v21 = vld [vmem:[#allocation2] sm:$0xff]
    %v22 = vmul.f32 %v21, %v21
    %vm23 = vcmask 261120
    %v24 = vsel %vm23, %v22, 0.0
    %25 = vadd.xlane.f32.xlu0 %v24
    %v26 = vpop.xlane.xlu0 %25
    %v27 = vrsqrt.pop %v26
    %v28 = vmul.f32 %v21, %v27
    %v29 = vmax.f32 %v28, 0.0
    %v30 = vadd.f32 %v29, 1e-12
    %v31 = vlog2.pop %v30
    %v32 = vmul.f32 %v31, 0.6931472
    %33 = vst.msk [vmem:[#allocation5] sm:$0xff] %vm23, %v32
    // Predicated region
    $region10: #{tpu_custom_call.1} parent=1 // pred_check
      _
    $region11: #{tpu_custom_call.1} parent=1 // pred_check_branch
      %35 = sbr.rel (0) target = $region13
    $region12: #{tpu_custom_call.1} parent=1 // pred_region
      %s37 = ssub.s32 128, 128
      %38 = vsyncadd [#allocation4], %s37
      %s40 = sshll.u32 [#allocation5], 4
      %s41 = int_to_ptr.vmem [resolvable:$true] %s40
      %43 = dma.vmem_to_hbm [thread:$0]  %s41, 128, %s1, [#allocation4]
    $region13: #{tpu_custom_call.1} parent=1 // pred_fallthru
      _
    // Predicated region
    $region14: #{tpu_custom_call.1} parent=1 // pred_check
      _
    $region15: #{tpu_custom_call.1} parent=1 // pred_check_branch
      %45 = sbr.rel (0) target = $region17
    $region16: #{tpu_custom_call.1} parent=1 // pred_region
      %46 = dma.done [#allocation4], 128
    $region17: #{tpu_custom_call.1} parent=1 // pred_fallthru
      _
    %47 = vsyncpa [#allocation3], 1
    %48 = vsyncpa [#allocation4], 1

</llo_original>
